<compile_context>
chip_gen: v7x
topology: tpu7x:2x2x1
jax: 0.10.0
libtpu: 0.0.40
codegen_flags: <defaults>
</compile_context>

<pallas_src>
import functools

import jax
import jax.numpy as jnp
from jax.experimental import pallas as pl
from jax.experimental.pallas import tpu as pltpu


def _round_up(a, b):
    return ((a + b - 1) // b) * b


def _keep_mask_kernel(bits_ref, keep_ref, *, low, high, temporal_thresh, V):
    """Builds the (tT, V) keep pattern for one tile of frames.

    bits_ref : (tT, W) int32, uniform in [0, 2**24).  Cols [0,V) = scores,
               col V = temporal draw, col V+1 = k draw.
    keep_ref : (tT, V); 1 where the keypoint survives, 0 where it is dropped.
    """
    bits = bits_ref[...]
    tT = keep_ref.shape[0]

    score = bits[:, 0:V]                                  # (tT, V)
    temporal_b = bits[:, V:V + 1]                         # (tT, 1)
    k_b = bits[:, V + 1:V + 2]                            # (tT, 1)

    # Frame selected for masking iff u <= temporal_p (integer compare on the
    # 24-bit quantized uniform; boundary behaviour differs from torch only at
    # the 2^-24 level).
    frame_masked = temporal_b < jnp.int32(temporal_thresh)        # (tT, 1)

    # k_t ~ Uniform{low, ..., high}.
    span = high - low + 1
    k = jnp.int32(low) + (((k_b >> 8) * jnp.int32(span)) >> 16)   # (tT, 1)
    k = jnp.where(frame_masked, k, 0)          # unselected frames drop nothing

    # Composite integer key: high score bits with the keypoint index packed in
    # the low bits for a deterministic tie-break.  rank(v) = #keys smaller than
    # key(v); "rank < k" keeps exactly the k smallest keys -> a uniform random
    # subset of k distinct keypoints.
    nb = max(1, (V - 1).bit_length())          # bits needed for the index
    col = jax.lax.broadcasted_iota(jnp.int32, (tT, V), 1)
    key = ((score >> nb) << nb) | col                              # (tT, V)

    rank = jnp.zeros((tT, V), jnp.int32)
    for w in range(V):                         # small static unroll, pure VPU
        rank = rank + (key[:, w:w + 1] < key).astype(jnp.int32)

    dropped = rank < k                                             # (tT, V)
    keep_ref[...] = jnp.where(dropped, 0.0, 1.0).astype(keep_ref.dtype)


def random_mask_keypoint_between(x, mask, rng_key, low=None, high=None,
                                 temporal_p=1.0):
    """Same forward semantics as the PyTorch RandomMaskKeypointBetween."""
    C, T, V = x.shape
    low_i = 0 if low is None else max(0, int(low))
    high_i = V if high is None else min(int(high), V)
    p = min(max(float(temporal_p), 0.0), 1.0)
    temporal_thresh = int(round(p * (1 << 24)))

    # Single lane-padded draw of 24-bit uniforms covering scores + the two
    # per-frame decisions.
    W = max(128, _round_up(V + 2, 128))
    bits = jax.random.randint(rng_key, (T, W), 0, 1 << 24, dtype=jnp.int32)

    # Tile over frames (rows independent): keeps VMEM small for large T and
    # lets Megacore shard the grid axis.
    tT = T if T <= 512 else 512                # 512 is a multiple of 8
    grid_t = pl.cdiv(T, tT)

    kernel = functools.partial(
        _keep_mask_kernel, low=low_i, high=high_i,
        temporal_thresh=temporal_thresh, V=V)

    keep = pl.pallas_call(
        kernel,
        out_shape=jax.ShapeDtypeStruct((T, V), mask.dtype),
        grid=(grid_t,),
        in_specs=[pl.BlockSpec((tT, W), lambda i: (i, 0))],
        out_specs=pl.BlockSpec((tT, V), lambda i: (i, 0)),
        compiler_params=pltpu.CompilerParams(
            dimension_semantics=("parallel",)),
    )(bits)

    # Hot path stays in XLA: broadcast multiply fuses with neighbours instead
    # of streaming the (C, T, V) mask through the kernel.
    out_mask = mask * keep[None, :, :]
    return x, out_mask


if __name__ == "__main__":
    root = jax.random.PRNGKey(0)
    kx, km, kr = jax.random.split(root, 3)

    C, T, V = 3, 16, 17  # channels, frames, keypoints (COCO-like)
    x = jax.random.normal(kx, (C, T, V), dtype=jnp.float32)
    mask = (jax.random.uniform(km, (C, T, V)) > 0.1).astype(jnp.float32)

    x_out, out_mask = random_mask_keypoint_between(
        x, mask, kr, low=2, high=6, temporal_p=0.7)

    x_out = jax.block_until_ready(x_out)
    out_mask = jax.block_until_ready(out_mask)

    # Forward-semantics sanity checks.
    assert x_out.shape == x.shape and out_mask.shape == x.shape
    assert bool(jnp.all(x_out == x))                       # x passes through
    assert bool(jnp.all(out_mask <= mask))                 # only ever zeroes
    assert bool(jnp.all((out_mask == 0.0) | (out_mask == mask)))

    # The random drop pattern is identical across channels (checked where the
    # input mask is non-zero in every channel).
    valid_all = jnp.all(mask != 0.0, axis=0)               # (T, V)
    dropped_c = (out_mask == 0.0) & (mask != 0.0)          # (C, T, V)
    same_across_c = jnp.all(dropped_c == dropped_c[0:1], axis=0)   # (T, V)
    assert bool(jnp.all(jnp.where(valid_all, same_across_c, True)))

    # Per-frame drop count never exceeds `high`.
    per_frame = jnp.sum(dropped_c[0].astype(jnp.int32), axis=-1)   # (T,)
    assert bool(jnp.all(per_frame <= 6))

    print("KERNEL_OK")
</pallas_src>

<mosaic_0001>
module attributes {stable_mosaic.version = 11 : i64} {
  func.func @_keep_mask_kernel(%arg0: i32, %arg1: memref<16x128xi32, #tpu.memory_space<vmem>>, %arg2: memref<16x17xf32, #tpu.memory_space<vmem>>) attributes {dimension_semantics = [#tpu.dimension_semantics<parallel>], iteration_bounds = array<i64: 1>, scalar_prefetch = 0 : i64, scratch_operands = 0 : i64, tpu.core_type = #tpu.core_type<tc>, window_params = [{transform_indices = @transform_0, window_bounds = array<i64: 16, 128>}, {transform_indices = @transform_1, window_bounds = array<i64: 16, 17>}]} {
    %c0 = arith.constant 0 : index
    %c0_0 = arith.constant 0 : index
    %0 = vector.load %arg1[%c0, %c0_0] : memref<16x128xi32, #tpu.memory_space<vmem>>, vector<16x128xi32>
    %1 = vector.extract_strided_slice %0 {offsets = [0, 0], sizes = [16, 17], strides = [1, 1]} : vector<16x128xi32> to vector<16x17xi32>
    %2 = vector.extract_strided_slice %0 {offsets = [0, 17], sizes = [16, 1], strides = [1, 1]} : vector<16x128xi32> to vector<16x1xi32>
    %3 = vector.extract_strided_slice %0 {offsets = [0, 18], sizes = [16, 1], strides = [1, 1]} : vector<16x128xi32> to vector<16x1xi32>
    %c11744051_i32 = arith.constant 11744051 : i32
    %4 = vector.broadcast %c11744051_i32 : i32 to vector<16x1xi32>
    %5 = arith.cmpi slt, %2, %4 : vector<16x1xi32>
    %c8_i32 = arith.constant 8 : i32
    %6 = vector.broadcast %c8_i32 : i32 to vector<16x1xi32>
    %7 = arith.shrsi %3, %6 : vector<16x1xi32>
    %c5_i32 = arith.constant 5 : i32
    %8 = vector.broadcast %c5_i32 : i32 to vector<16x1xi32>
    %9 = arith.muli %7, %8 : vector<16x1xi32>
    %c16_i32 = arith.constant 16 : i32
    %10 = vector.broadcast %c16_i32 : i32 to vector<16x1xi32>
    %11 = arith.shrsi %9, %10 : vector<16x1xi32>
    %c2_i32 = arith.constant 2 : i32
    %12 = vector.broadcast %c2_i32 : i32 to vector<16x1xi32>
    %13 = arith.addi %12, %11 : vector<16x1xi32>
    %c0_i32 = arith.constant 0 : i32
    %14 = vector.broadcast %c0_i32 : i32 to vector<16x1xi32>
    %15 = arith.select %5, %13, %14 : vector<16x1xi1>, vector<16x1xi32>
    %16 = tpu.iota {dimensions = array<i32: 1>} : vector<16x17xi32>
    %c5_i32_1 = arith.constant 5 : i32
    %17 = vector.broadcast %c5_i32_1 : i32 to vector<16x17xi32>
    %18 = arith.shrsi %1, %17 : vector<16x17xi32>
    %c5_i32_2 = arith.constant 5 : i32
    %19 = vector.broadcast %c5_i32_2 : i32 to vector<16x17xi32>
    %20 = arith.shli %18, %19 : vector<16x17xi32>
    %21 = arith.ori %20, %16 : vector<16x17xi32>
    %c0_i32_3 = arith.constant 0 : i32
    %22 = vector.broadcast %c0_i32_3 : i32 to vector<16x17xi32>
    %23 = vector.extract_strided_slice %21 {offsets = [0, 0], sizes = [16, 1], strides = [1, 1]} : vector<16x17xi32> to vector<16x1xi32>
    %24 = vector.broadcast %23 : vector<16x1xi32> to vector<16x17xi32>
    %25 = arith.cmpi slt, %24, %21 : vector<16x17xi32>
    %26 = arith.extui %25 : vector<16x17xi1> to vector<16x17xi32>
    %27 = arith.addi %22, %26 : vector<16x17xi32>
    %28 = vector.extract_strided_slice %21 {offsets = [0, 1], sizes = [16, 1], strides = [1, 1]} : vector<16x17xi32> to vector<16x1xi32>
    %29 = vector.broadcast %28 : vector<16x1xi32> to vector<16x17xi32>
    %30 = arith.cmpi slt, %29, %21 : vector<16x17xi32>
    %31 = arith.extui %30 : vector<16x17xi1> to vector<16x17xi32>
    %32 = arith.addi %27, %31 : vector<16x17xi32>
    %33 = vector.extract_strided_slice %21 {offsets = [0, 2], sizes = [16, 1], strides = [1, 1]} : vector<16x17xi32> to vector<16x1xi32>
    %34 = vector.broadcast %33 : vector<16x1xi32> to vector<16x17xi32>
    %35 = arith.cmpi slt, %34, %21 : vector<16x17xi32>
    %36 = arith.extui %35 : vector<16x17xi1> to vector<16x17xi32>
    %37 = arith.addi %32, %36 : vector<16x17xi32>
    %38 = vector.extract_strided_slice %21 {offsets = [0, 3], sizes = [16, 1], strides = [1, 1]} : vector<16x17xi32> to vector<16x1xi32>
    %39 = vector.broadcast %38 : vector<16x1xi32> to vector<16x17xi32>
    %40 = arith.cmpi slt, %39, %21 : vector<16x17xi32>
    %41 = arith.extui %40 : vector<16x17xi1> to vector<16x17xi32>
    %42 = arith.addi %37, %41 : vector<16x17xi32>
    %43 = vector.extract_strided_slice %21 {offsets = [0, 4], sizes = [16, 1], strides = [1, 1]} : vector<16x17xi32> to vector<16x1xi32>
    %44 = vector.broadcast %43 : vector<16x1xi32> to vector<16x17xi32>
    %45 = arith.cmpi slt, %44, %21 : vector<16x17xi32>
    %46 = arith.extui %45 : vector<16x17xi1> to vector<16x17xi32>
    %47 = arith.addi %42, %46 : vector<16x17xi32>
    %48 = vector.extract_strided_slice %21 {offsets = [0, 5], sizes = [16, 1], strides = [1, 1]} : vector<16x17xi32> to vector<16x1xi32>
    %49 = vector.broadcast %48 : vector<16x1xi32> to vector<16x17xi32>
    %50 = arith.cmpi slt, %49, %21 : vector<16x17xi32>
    %51 = arith.extui %50 : vector<16x17xi1> to vector<16x17xi32>
    %52 = arith.addi %47, %51 : vector<16x17xi32>
    %53 = vector.extract_strided_slice %21 {offsets = [0, 6], sizes = [16, 1], strides = [1, 1]} : vector<16x17xi32> to vector<16x1xi32>
    %54 = vector.broadcast %53 : vector<16x1xi32> to vector<16x17xi32>
    %55 = arith.cmpi slt, %54, %21 : vector<16x17xi32>
    %56 = arith.extui %55 : vector<16x17xi1> to vector<16x17xi32>
    %57 = arith.addi %52, %56 : vector<16x17xi32>
    %58 = vector.extract_strided_slice %21 {offsets = [0, 7], sizes = [16, 1], strides = [1, 1]} : vector<16x17xi32> to vector<16x1xi32>
    %59 = vector.broadcast %58 : vector<16x1xi32> to vector<16x17xi32>
    %60 = arith.cmpi slt, %59, %21 : vector<16x17xi32>
    %61 = arith.extui %60 : vector<16x17xi1> to vector<16x17xi32>
    %62 = arith.addi %57, %61 : vector<16x17xi32>
    %63 = vector.extract_strided_slice %21 {offsets = [0, 8], sizes = [16, 1], strides = [1, 1]} : vector<16x17xi32> to vector<16x1xi32>
    %64 = vector.broadcast %63 : vector<16x1xi32> to vector<16x17xi32>
    %65 = arith.cmpi slt, %64, %21 : vector<16x17xi32>
    %66 = arith.extui %65 : vector<16x17xi1> to vector<16x17xi32>
    %67 = arith.addi %62, %66 : vector<16x17xi32>
    %68 = vector.extract_strided_slice %21 {offsets = [0, 9], sizes = [16, 1], strides = [1, 1]} : vector<16x17xi32> to vector<16x1xi32>
    %69 = vector.broadcast %68 : vector<16x1xi32> to vector<16x17xi32>
    %70 = arith.cmpi slt, %69, %21 : vector<16x17xi32>
    %71 = arith.extui %70 : vector<16x17xi1> to vector<16x17xi32>
    %72 = arith.addi %67, %71 : vector<16x17xi32>
    %73 = vector.extract_strided_slice %21 {offsets = [0, 10], sizes = [16, 1], strides = [1, 1]} : vector<16x17xi32> to vector<16x1xi32>
    %74 = vector.broadcast %73 : vector<16x1xi32> to vector<16x17xi32>
    %75 = arith.cmpi slt, %74, %21 : vector<16x17xi32>
    %76 = arith.extui %75 : vector<16x17xi1> to vector<16x17xi32>
    %77 = arith.addi %72, %76 : vector<16x17xi32>
    %78 = vector.extract_strided_slice %21 {offsets = [0, 11], sizes = [16, 1], strides = [1, 1]} : vector<16x17xi32> to vector<16x1xi32>
    %79 = vector.broadcast %78 : vector<16x1xi32> to vector<16x17xi32>
    %80 = arith.cmpi slt, %79, %21 : vector<16x17xi32>
    %81 = arith.extui %80 : vector<16x17xi1> to vector<16x17xi32>
    %82 = arith.addi %77, %81 : vector<16x17xi32>
    %83 = vector.extract_strided_slice %21 {offsets = [0, 12], sizes = [16, 1], strides = [1, 1]} : vector<16x17xi32> to vector<16x1xi32>
    %84 = vector.broadcast %83 : vector<16x1xi32> to vector<16x17xi32>
    %85 = arith.cmpi slt, %84, %21 : vector<16x17xi32>
    %86 = arith.extui %85 : vector<16x17xi1> to vector<16x17xi32>
    %87 = arith.addi %82, %86 : vector<16x17xi32>
    %88 = vector.extract_strided_slice %21 {offsets = [0, 13], sizes = [16, 1], strides = [1, 1]} : vector<16x17xi32> to vector<16x1xi32>
    %89 = vector.broadcast %88 : vector<16x1xi32> to vector<16x17xi32>
    %90 = arith.cmpi slt, %89, %21 : vector<16x17xi32>
    %91 = arith.extui %90 : vector<16x17xi1> to vector<16x17xi32>
    %92 = arith.addi %87, %91 : vector<16x17xi32>
    %93 = vector.extract_strided_slice %21 {offsets = [0, 14], sizes = [16, 1], strides = [1, 1]} : vector<16x17xi32> to vector<16x1xi32>
    %94 = vector.broadcast %93 : vector<16x1xi32> to vector<16x17xi32>
    %95 = arith.cmpi slt, %94, %21 : vector<16x17xi32>
    %96 = arith.extui %95 : vector<16x17xi1> to vector<16x17xi32>
    %97 = arith.addi %92, %96 : vector<16x17xi32>
    %98 = vector.extract_strided_slice %21 {offsets = [0, 15], sizes = [16, 1], strides = [1, 1]} : vector<16x17xi32> to vector<16x1xi32>
    %99 = vector.broadcast %98 : vector<16x1xi32> to vector<16x17xi32>
    %100 = arith.cmpi slt, %99, %21 : vector<16x17xi32>
    %101 = arith.extui %100 : vector<16x17xi1> to vector<16x17xi32>
    %102 = arith.addi %97, %101 : vector<16x17xi32>
    %103 = vector.extract_strided_slice %21 {offsets = [0, 16], sizes = [16, 1], strides = [1, 1]} : vector<16x17xi32> to vector<16x1xi32>
    %104 = vector.broadcast %103 : vector<16x1xi32> to vector<16x17xi32>
    %105 = arith.cmpi slt, %104, %21 : vector<16x17xi32>
    %106 = arith.extui %105 : vector<16x17xi1> to vector<16x17xi32>
    %107 = arith.addi %102, %106 : vector<16x17xi32>
    %108 = vector.broadcast %15 : vector<16x1xi32> to vector<16x17xi32>
    %109 = arith.cmpi slt, %107, %108 : vector<16x17xi32>
    %cst = arith.constant 0.000000e+00 : f32
    %cst_4 = arith.constant 1.000000e+00 : f32
    %110 = vector.broadcast %cst : f32 to vector<16x17xf32>
    %111 = vector.broadcast %cst_4 : f32 to vector<16x17xf32>
    %112 = arith.select %109, %110, %111 : vector<16x17xi1>, vector<16x17xf32>
    %c0_5 = arith.constant 0 : index
    %c0_6 = arith.constant 0 : index
    %113 = vector.load %arg2[%c0_5, %c0_6] : memref<16x17xf32, #tpu.memory_space<vmem>>, vector<16x17xf32>
    tpu.vector_store %arg2[%c0_5, %c0_6], %112 {strides = array<i32>} : memref<16x17xf32, #tpu.memory_space<vmem>>, vector<16x17xf32>,
    return
  }
  func.func @transform_0(%arg0: i32) -> (i32, i32) {
    %c0_i32 = arith.constant 0 : i32
    %c0_i32_0 = arith.constant 0 : i32
    return %arg0, %c0_i32 : i32, i32
  }
  func.func @transform_1(%arg0: i32) -> (i32, i32) {
    %c0_i32 = arith.constant 0 : i32
    %c0_i32_0 = arith.constant 0 : i32
    return %arg0, %c0_i32 : i32, i32
  }
}

</mosaic_0001>

<llo_original>
// kernel: tpu_custom_call.1
$region0: #{tpu_custom_call.1}
  #allocation0 [shape = 'u32[]', space=smem, size = 0x4, offset = 0x4, fixed_abs, tag = 'smem constant byte address 0x4 - core index']
  #allocation1 [shape = 'u32[144,128]{1,0:T(1,128)}', space=vmem, size = 0x12000, scoped, tag = 'internal scratch']
  %s0 = inlined_call_operand.hbm [shape: s32[16,128], index: 0, kind: input, shape index: {}]
  %s1 = inlined_call_operand.hbm [shape: f32[16,17], index: 1, kind: output, shape index: {}]
  %s2 = sld [smem:[#allocation0]]
  $region18: #{tpu_custom_call.1} parent=0
    _
  %s4 = ssub.s32 1, %s2
  %s5 = scalar_select 0, %s4, %s2
  $region1: #{tpu_custom_call.1} parent=0
    #allocation2 [shape = 'u8[8192]{0}', space=vmem, size = 0x2000, scoped, tag = 'input window, operand 0, single buffered']
    #allocation3 [shape = 's32[1]{0}', space=sflag, size = 0x4, scoped, tag = 'scoped memory for tpu_custom_call.1']
    #allocation4 [shape = 's32[1]{0}', space=sflag, size = 0x4, scoped, tag = 'scoped memory for tpu_custom_call.1']
    #allocation5 [shape = 'u8[8192]{0}', space=vmem, size = 0x2000, scoped, tag = 'output window, operand 0, single buffered']
    %6 = vsyncpa [#allocation3], 0
    %7 = vsyncpa [#allocation4], 0
    // Predicated region
    $region2: #{tpu_custom_call.1} parent=1 // pred_check
      _
    $region3: #{tpu_custom_call.1} parent=1 // pred_check_branch
      %9 = sbr.rel (0) target = $region5
    $region4: #{tpu_custom_call.1} parent=1 // pred_region
      %s11 = ssub.s32 256, 256
      %12 = vsyncadd [#allocation3], %s11
      %s13 = sshll.u32 [#allocation2], 4
      %s14 = int_to_ptr.vmem [resolvable:$true] %s13
      %19 = dma.hbm_to_vmem [thread:$0]  %s0, 256, %s14, [#allocation3], 128, 128, 8
    $region5: #{tpu_custom_call.1} parent=1 // pred_fallthru
      _
    // Predicated region
    $region6: #{tpu_custom_call.1} parent=1 // pred_check
      _
    $region7: #{tpu_custom_call.1} parent=1 // pred_check_branch
      %21 = sbr.rel (0) target = $region9
    $region8: #{tpu_custom_call.1} parent=1 // pred_region
      %22 = dma.done [#allocation3], 256
    $region9: #{tpu_custom_call.1} parent=1 // pred_fallthru
      _
    %v23 = vld [vmem:[#allocation2] sm:$0xff]
    %v24 = vld [vmem:[#allocation2 + $0x8] sm:$0xff]
    %vm25 = vcmp.lt.s32.totalorder %v23, 11744051
    %vm26 = vcmp.lt.s32.totalorder %v24, 11744051
    %v27 = vshra.s32 %v23, 8
    %v28 = vshra.s32 %v24, 8
    %v29 = vmul.u32 %v27, 5
    %v30 = vmul.u32 %v28, 5
    %v31 = vshra.s32 %v29, 16
    %v32 = vshra.s32 %v30, 16
    %v33 = vadd.s32 %v31, 2
    %v34 = vadd.s32 %v32, 2
    %35 = vrot.lane.b32.xlu0 %v33, 127
    %v36 = vpop.permute.xlu0 %35
    %37 = vrot.lane.b32.xlu0 %v34, 127
    %v38 = vpop.permute.xlu0 %37
    %v39 = vsel %vm25, %v36, 0
    %v40 = vsel %vm26, %v38, 0
    %v41 = vlaneseq
    %v42 = vand.u32 %v41, 127
    %v43 = vshra.s32 %v23, 5
    %v44 = vshra.s32 %v24, 5
    %v45 = vshll.u32 %v43, 5
    %v46 = vshll.u32 %v44, 5
    %v47 = vor.u32 %v45, %v42
    %v48 = vor.u32 %v46, %v42
    %49 = vset.pattern.permute.xlu0 0
    %50 = vperm.xlu0 %49, %v47
    %v51 = vpop.permute.xlu0 %50
    %52 = vset.pattern.permute.xlu0 0
    %53 = vperm.xlu0 %52, %v48
    %v54 = vpop.permute.xlu0 %53
    %vm55 = vcmp.lt.s32.totalorder %v51, %v47
    %vm56 = vcmp.lt.s32.totalorder %v54, %v48
    %v57 = vsel %vm55, 1, 0
    %v58 = vsel %vm56, 1, 0
    %59 = vset.pattern.permute.xlu0 1
    %60 = vperm.xlu0 %59, %v47
    %v61 = vpop.permute.xlu0 %60
    %62 = vset.pattern.permute.xlu0 1
    %63 = vperm.xlu0 %62, %v48
    %v64 = vpop.permute.xlu0 %63
    %vm65 = vcmp.lt.s32.totalorder %v61, %v47
    %vm66 = vcmp.lt.s32.totalorder %v64, %v48
    %v67 = vsel %vm65, 1, 0
    %v68 = vsel %vm66, 1, 0
    %v69 = vadd.s32 %v57, %v67
    %v70 = vadd.s32 %v58, %v68
    %71 = vset.pattern.permute.xlu0 2
    %72 = vperm.xlu0 %71, %v47
    %v73 = vpop.permute.xlu0 %72
    %74 = vset.pattern.permute.xlu0 2
    %75 = vperm.xlu0 %74, %v48
    %v76 = vpop.permute.xlu0 %75
    %vm77 = vcmp.lt.s32.totalorder %v73, %v47
    %vm78 = vcmp.lt.s32.totalorder %v76, %v48
    %v79 = vsel %vm77, 1, 0
    %v80 = vsel %vm78, 1, 0
    %v81 = vadd.s32 %v69, %v79
    %v82 = vadd.s32 %v70, %v80
    %83 = vset.pattern.permute.xlu0 3
    %84 = vperm.xlu0 %83, %v47
    %v85 = vpop.permute.xlu0 %84
    %86 = vset.pattern.permute.xlu0 3
    %87 = vperm.xlu0 %86, %v48
    %v88 = vpop.permute.xlu0 %87
    %vm89 = vcmp.lt.s32.totalorder %v85, %v47
    %vm90 = vcmp.lt.s32.totalorder %v88, %v48
    %v91 = vsel %vm89, 1, 0
    %v92 = vsel %vm90, 1, 0
    %v93 = vadd.s32 %v81, %v91
    %v94 = vadd.s32 %v82, %v92
    %95 = vset.pattern.permute.xlu0 4
    %96 = vperm.xlu0 %95, %v47
    %v97 = vpop.permute.xlu0 %96
    %98 = vset.pattern.permute.xlu0 4
    %99 = vperm.xlu0 %98, %v48
    %v100 = vpop.permute.xlu0 %99
    %vm101 = vcmp.lt.s32.totalorder %v97, %v47
    %vm102 = vcmp.lt.s32.totalorder %v100, %v48
    %v103 = vsel %vm101, 1, 0
    %v104 = vsel %vm102, 1, 0
    %v105 = vadd.s32 %v93, %v103
    %v106 = vadd.s32 %v94, %v104
    %107 = vset.pattern.permute.xlu0 5
    %108 = vperm.xlu0 %107, %v47
    %v109 = vpop.permute.xlu0 %108
    %110 = vset.pattern.permute.xlu0 5
    %111 = vperm.xlu0 %110, %v48
    %v112 = vpop.permute.xlu0 %111
    %vm113 = vcmp.lt.s32.totalorder %v109, %v47
    %vm114 = vcmp.lt.s32.totalorder %v112, %v48
    %v115 = vsel %vm113, 1, 0
    %v116 = vsel %vm114, 1, 0
    %v117 = vadd.s32 %v105, %v115
    %v118 = vadd.s32 %v106, %v116
    %119 = vset.pattern.permute.xlu0 6
    %120 = vperm.xlu0 %119, %v47
    %v121 = vpop.permute.xlu0 %120
    %122 = vset.pattern.permute.xlu0 6
    %123 = vperm.xlu0 %122, %v48
    %v124 = vpop.permute.xlu0 %123
    %vm125 = vcmp.lt.s32.totalorder %v121, %v47
    %vm126 = vcmp.lt.s32.totalorder %v124, %v48
    %v127 = vsel %vm125, 1, 0
    %v128 = vsel %vm126, 1, 0
    %v129 = vadd.s32 %v117, %v127
    %v130 = vadd.s32 %v118, %v128
    %131 = vset.pattern.permute.xlu0 7
    %132 = vperm.xlu0 %131, %v47
    %v133 = vpop.permute.xlu0 %132
    %134 = vset.pattern.permute.xlu0 7
    %135 = vperm.xlu0 %134, %v48
    %v136 = vpop.permute.xlu0 %135
    %vm137 = vcmp.lt.s32.totalorder %v133, %v47
    %vm138 = vcmp.lt.s32.totalorder %v136, %v48
    %v139 = vsel %vm137, 1, 0
    %v140 = vsel %vm138, 1, 0
    %v141 = vadd.s32 %v129, %v139
    %v142 = vadd.s32 %v130, %v140
    %143 = vset.pattern.permute.xlu0 8
    %144 = vperm.xlu0 %143, %v47
    %v145 = vpop.permute.xlu0 %144
    %146 = vset.pattern.permute.xlu0 8
    %147 = vperm.xlu0 %146, %v48
    %v148 = vpop.permute.xlu0 %147
    %vm149 = vcmp.lt.s32.totalorder %v145, %v47
    %vm150 = vcmp.lt.s32.totalorder %v148, %v48
    %v151 = vsel %vm149, 1, 0
    %v152 = vsel %vm150, 1, 0
    %v153 = vadd.s32 %v141, %v151
    %v154 = vadd.s32 %v142, %v152
    %155 = vset.pattern.permute.xlu0 9
    %156 = vperm.xlu0 %155, %v47
    %v157 = vpop.permute.xlu0 %156
    %158 = vset.pattern.permute.xlu0 9
    %159 = vperm.xlu0 %158, %v48
    %v160 = vpop.permute.xlu0 %159
    %vm161 = vcmp.lt.s32.totalorder %v157, %v47
    %vm162 = vcmp.lt.s32.totalorder %v160, %v48
    %v163 = vsel %vm161, 1, 0
    %v164 = vsel %vm162, 1, 0
    %v165 = vadd.s32 %v153, %v163
    %v166 = vadd.s32 %v154, %v164
    %167 = vset.pattern.permute.xlu0 10
    %168 = vperm.xlu0 %167, %v47
    %v169 = vpop.permute.xlu0 %168
    %170 = vset.pattern.permute.xlu0 10
    %171 = vperm.xlu0 %170, %v48
    %v172 = vpop.permute.xlu0 %171
    %vm173 = vcmp.lt.s32.totalorder %v169, %v47
    %vm174 = vcmp.lt.s32.totalorder %v172, %v48
    %v175 = vsel %vm173, 1, 0
    %v176 = vsel %vm174, 1, 0
    %v177 = vadd.s32 %v165, %v175
    %v178 = vadd.s32 %v166, %v176
    %179 = vset.pattern.permute.xlu0 11
    %180 = vperm.xlu0 %179, %v47
    %v181 = vpop.permute.xlu0 %180
    %182 = vset.pattern.permute.xlu0 11
    %183 = vperm.xlu0 %182, %v48
    %v184 = vpop.permute.xlu0 %183
    %vm185 = vcmp.lt.s32.totalorder %v181, %v47
    %vm186 = vcmp.lt.s32.totalorder %v184, %v48
    %v187 = vsel %vm185, 1, 0
    %v188 = vsel %vm186, 1, 0
    %v189 = vadd.s32 %v177, %v187
    %v190 = vadd.s32 %v178, %v188
    %191 = vset.pattern.permute.xlu0 12
    %192 = vperm.xlu0 %191, %v47
    %v193 = vpop.permute.xlu0 %192
    %194 = vset.pattern.permute.xlu0 12
    %195 = vperm.xlu0 %194, %v48
    %v196 = vpop.permute.xlu0 %195
    %vm197 = vcmp.lt.s32.totalorder %v193, %v47
    %vm198 = vcmp.lt.s32.totalorder %v196, %v48
    %v199 = vsel %vm197, 1, 0
    %v200 = vsel %vm198, 1, 0
    %v201 = vadd.s32 %v189, %v199
    %v202 = vadd.s32 %v190, %v200
    %203 = vset.pattern.permute.xlu0 13
    %204 = vperm.xlu0 %203, %v47
    %v205 = vpop.permute.xlu0 %204
    %206 = vset.pattern.permute.xlu0 13
    %207 = vperm.xlu0 %206, %v48
    %v208 = vpop.permute.xlu0 %207
    %vm209 = vcmp.lt.s32.totalorder %v205, %v47
    %vm210 = vcmp.lt.s32.totalorder %v208, %v48
    %v211 = vsel %vm209, 1, 0
    %v212 = vsel %vm210, 1, 0
    %v213 = vadd.s32 %v201, %v211
    %v214 = vadd.s32 %v202, %v212
    %215 = vset.pattern.permute.xlu0 14
    %216 = vperm.xlu0 %215, %v47
    %v217 = vpop.permute.xlu0 %216
    %218 = vset.pattern.permute.xlu0 14
    %219 = vperm.xlu0 %218, %v48
    %v220 = vpop.permute.xlu0 %219
    %vm221 = vcmp.lt.s32.totalorder %v217, %v47
    %vm222 = vcmp.lt.s32.totalorder %v220, %v48
    %v223 = vsel %vm221, 1, 0
    %v224 = vsel %vm222, 1, 0
    %v225 = vadd.s32 %v213, %v223
    %v226 = vadd.s32 %v214, %v224
    %227 = vset.pattern.permute.xlu0 15
    %228 = vperm.xlu0 %227, %v47
    %v229 = vpop.permute.xlu0 %228
    %230 = vset.pattern.permute.xlu0 15
    %231 = vperm.xlu0 %230, %v48
    %v232 = vpop.permute.xlu0 %231
    %vm233 = vcmp.lt.s32.totalorder %v229, %v47
    %vm234 = vcmp.lt.s32.totalorder %v232, %v48
    %v235 = vsel %vm233, 1, 0
    %v236 = vsel %vm234, 1, 0
    %v237 = vadd.s32 %v225, %v235
    %v238 = vadd.s32 %v226, %v236
    %239 = vset.pattern.permute.xlu0 16
    %240 = vperm.xlu0 %239, %v47
    %v241 = vpop.permute.xlu0 %240
    %242 = vset.pattern.permute.xlu0 16
    %243 = vperm.xlu0 %242, %v48
    %v244 = vpop.permute.xlu0 %243
    %vm245 = vcmp.lt.s32.totalorder %v241, %v47
    %vm246 = vcmp.lt.s32.totalorder %v244, %v48
    %v247 = vsel %vm245, 1, 0
    %v248 = vsel %vm246, 1, 0
    %v249 = vadd.s32 %v237, %v247
    %v250 = vadd.s32 %v238, %v248
    %251 = vset.pattern.permute.xlu0 17
    %252 = vperm.xlu0 %251, %v39
    %v253 = vpop.permute.xlu0 %252
    %254 = vset.pattern.permute.xlu0 17
    %255 = vperm.xlu0 %254, %v40
    %v256 = vpop.permute.xlu0 %255
    %vm257 = vcmp.lt.s32.totalorder %v249, %v253
    %vm258 = vcmp.lt.s32.totalorder %v250, %v256
    %v259 = vsel %vm257, 0.0, 1.0
    %v260 = vsel %vm258, 0.0, 1.0
    %vm261 = vcmask 138240
    %262 = vst.msk [vmem:[#allocation5] sm:$0xff] %vm261, %v259
    %263 = vst.msk [vmem:[#allocation5 + $0x8] sm:$0xff] %vm261, %v260
    // Predicated region
    $region10: #{tpu_custom_call.1} parent=1 // pred_check
      _
    $region11: #{tpu_custom_call.1} parent=1 // pred_check_branch
      %265 = sbr.rel (0) target = $region13
    $region12: #{tpu_custom_call.1} parent=1 // pred_region
      %s267 = ssub.s32 256, 256
      %268 = vsyncadd [#allocation4], %s267
      %s269 = sshll.u32 [#allocation5], 4
      %s270 = int_to_ptr.vmem [resolvable:$true] %s269
      %275 = dma.vmem_to_hbm [thread:$0]  %s270, 256, %s1, [#allocation4], 128, 128, 8
    $region13: #{tpu_custom_call.1} parent=1 // pred_fallthru
      _
    // Predicated region
    $region14: #{tpu_custom_call.1} parent=1 // pred_check
      _
    $region15: #{tpu_custom_call.1} parent=1 // pred_check_branch
      %277 = sbr.rel (0) target = $region17
    $region16: #{tpu_custom_call.1} parent=1 // pred_region
      %278 = dma.done [#allocation4], 256
    $region17: #{tpu_custom_call.1} parent=1 // pred_fallthru
      _
    %279 = vsyncpa [#allocation3], 1
    %280 = vsyncpa [#allocation4], 1

</llo_original>
